<compile_context>
chip_gen: v7x
topology: tpu7x:2x2x1
jax: 0.10.0
libtpu: 0.0.40
codegen_flags: <defaults>
</compile_context>

<pallas_src>
import functools

import jax
import jax.numpy as jnp
from jax.experimental import pallas as pl
from jax.experimental.pallas import tpu as pltpu

LANE = 128      # lane width (last-dim alignment)
SUBLANE = 8     # f32 sublane alignment (second-to-last dim)
TM_MAX = 512    # max batch rows per grid step (sweet spot per HBM-roofline data)


def _round_up(x, m):
    return ((x + m - 1) // m) * m


def _cdiv(a, b):
    return -(-a // b)


def _pad2d(a, rows, cols, dtype):
    """Zero-pad a 2D array to (rows, cols) and cast."""
    r, c = a.shape
    return jnp.pad(a, ((0, rows - r), (0, cols - c))).astype(dtype)


# ---------------------------------------------------------------------------
# Kernel: 4 x (bf16 matmul on MXU w/ f32 accumulation + f32 bias + f32 ReLU).
# Operands: x (f32), w1 (bf16), w_mid = stacked w2/w3 (bf16), w4 (bf16),
#           bias = packed b1..b4 rows of an (8, bias_pad) f32 array.
# ---------------------------------------------------------------------------
def _mlp_kernel(x_ref, w1_ref, wmid_ref, w4_ref, b_ref, out_ref):
    hid_pad = w1_ref.shape[1]
    out_pad = w4_ref.shape[1]
    n_mid = wmid_ref.shape[0]          # number of hidden->hidden layers (2)

    biases = b_ref[...]                # (8, bias_pad) f32; rows 0..3 = b1..b4

    # Cast x to bf16 in-kernel (x is DMA'd once as f32; no external cast pass).
    h = jnp.dot(x_ref[...].astype(jnp.bfloat16), w1_ref[...],
                preferred_element_type=jnp.float32)
    h = jnp.maximum(h + biases[0:1, :hid_pad], 0.0)

    for l in range(n_mid):             # static unroll: fc2, fc3
        h = jnp.dot(h.astype(jnp.bfloat16), wmid_ref[l],
                    preferred_element_type=jnp.float32)
        h = jnp.maximum(h + biases[l + 1:l + 2, :hid_pad], 0.0)

    h = jnp.dot(h.astype(jnp.bfloat16), w4_ref[...],
                preferred_element_type=jnp.float32)
    h = jnp.maximum(h + biases[n_mid + 1:n_mid + 2, :out_pad], 0.0)

    out_ref[...] = h.astype(out_ref.dtype)


# ---------------------------------------------------------------------------
# One-time parameter preparation (hoisted out of the per-call forward path).
# Zero padding keeps the real outputs exact: padded weight rows/cols and padded
# bias lanes are 0, so with ReLU every padded feature lane stays exactly 0.
# ---------------------------------------------------------------------------
def prepare_params(params, *, in_features, num_classes, hidden=77):
    in_pad = _round_up(in_features, LANE)
    hid_pad = _round_up(hidden, LANE)            # 77  -> 128
    out_pad = _round_up(num_classes, LANE)       # 10  -> 128
    bias_pad = max(hid_pad, out_pad)

    w1 = _pad2d(params["w1"], in_pad, hid_pad, jnp.bfloat16)
    wmid = jnp.stack([_pad2d(params["w2"], hid_pad, hid_pad, jnp.bfloat16),
                      _pad2d(params["w3"], hid_pad, hid_pad, jnp.bfloat16)])
    w4 = _pad2d(params["w4"], hid_pad, out_pad, jnp.bfloat16)

    bias = jnp.zeros((SUBLANE, bias_pad), jnp.float32)
    for row, name in enumerate(("b1", "b2", "b3", "b4")):
        b = params[name].reshape(-1).astype(jnp.float32)
        bias = bias.at[row, :b.shape[0]].set(b)

    return {"w1": w1, "wmid": wmid, "w4": w4, "bias": bias}


# ---------------------------------------------------------------------------
# Forward pass. `prepped` is the output of prepare_params (already padded /
# bf16-cast); the only per-call glue is a (usually no-op) zero row-pad of x.
# ---------------------------------------------------------------------------
@functools.partial(jax.jit, static_argnames=("num_classes",))
def johan_model_forward(x_nchw, prepped, *, num_classes):
    n = x_nchw.shape[0]
    x_flat = x_nchw.reshape(n, -1).astype(jnp.float32)
    in_features = x_flat.shape[1]

    in_pad, hid_pad = prepped["w1"].shape
    out_pad = prepped["w4"].shape[1]
    n_mid = prepped["wmid"].shape[0]
    if in_features > in_pad:
        raise ValueError("prepared params do not match input feature count")

    # Adaptive batch tiling: large aligned tiles, minimal row padding, and an
    # even number of >=2 grid steps when the batch spans multiple tiles so
    # dimension_semantics=("parallel",) can use both v7x TensorCores.
    n8 = _round_up(n, SUBLANE)
    num_tiles = _cdiv(n8, TM_MAX)
    if num_tiles > 1 and num_tiles % 2 == 1:
        num_tiles += 1
    tm = _round_up(_cdiv(n8, num_tiles), SUBLANE)
    n_pad = tm * num_tiles
    grid = (num_tiles,)

    # x stays f32 (cast to bf16 inside the kernel). Column padding is a no-op
    # when in_features is already lane-aligned (4*16*16 = 1024).
    xp = jnp.pad(x_flat, ((0, n_pad - n), (0, in_pad - in_features)))

    flops = 2 * n_pad * (in_pad * hid_pad + n_mid * hid_pad * hid_pad
                         + hid_pad * out_pad)
    bytes_accessed = (xp.size * 4                                   # x (f32)
                      + (prepped["w1"].size + prepped["wmid"].size
                         + prepped["w4"].size) * 2                  # bf16
                      + prepped["bias"].size * 4
                      + n_pad * out_pad * 4)                        # out (f32)

    out = pl.pallas_call(
        _mlp_kernel,
        out_shape=jax.ShapeDtypeStruct((n_pad, out_pad), jnp.float32),
        grid=grid,
        in_specs=[
            # x: one batch tile per grid step.
            pl.BlockSpec((tm, in_pad), lambda i: (i, 0)),
            # weights / biases: constant block index -> VMEM-resident across
            # grid steps (fetched once, never re-DMA'd).
            pl.BlockSpec(prepped["w1"].shape, lambda i: (0, 0)),
            pl.BlockSpec(prepped["wmid"].shape, lambda i: (0, 0, 0)),
            pl.BlockSpec(prepped["w4"].shape, lambda i: (0, 0)),
            pl.BlockSpec(prepped["bias"].shape, lambda i: (0, 0)),
        ],
        out_specs=pl.BlockSpec((tm, out_pad), lambda i: (i, 0)),
        compiler_params=pltpu.CompilerParams(
            dimension_semantics=("parallel",),
            vmem_limit_bytes=32 * 1024 * 1024),
        cost_estimate=pl.CostEstimate(flops=flops, transcendentals=0,
                                      bytes_accessed=bytes_accessed),
    )(xp, prepped["w1"], prepped["wmid"], prepped["w4"], prepped["bias"])

    # Free layout plumbing: drop padded rows / columns.
    return out[:n, :num_classes]


# ---------------------------------------------------------------------------
# Parameter init + pure-JAX references.
# ---------------------------------------------------------------------------
def init_params(key, in_features, num_classes, hidden=77):
    """Deterministic synthetic init (Kaiming-uniform-ish like nn.Linear)."""
    dims = [(in_features, hidden), (hidden, hidden),
            (hidden, hidden), (hidden, num_classes)]
    params = {}
    for i, (fin, fout) in enumerate(dims, start=1):
        key, kw, kb = jax.random.split(key, 3)
        bound = 1.0 / jnp.sqrt(jnp.float32(fin))
        params[f"w{i}"] = jax.random.uniform(
            kw, (fin, fout), jnp.float32, -bound, bound)
        params[f"b{i}"] = jax.random.uniform(
            kb, (1, fout), jnp.float32, -bound, bound)
    return params


def reference_forward_f32(x_nchw, params):
    """Pure-f32 JAX reference of the PyTorch forward."""
    h = x_nchw.reshape(x_nchw.shape[0], -1)
    for i in range(1, 5):
        h = h @ params[f"w{i}"] + params[f"b{i}"]
        h = jnp.maximum(h, 0.0)
    return h


def reference_forward_bf16(x_nchw, params):
    """JAX reference with the same bf16 weight/activation quantization as the
    kernel (f32 accumulation, f32 bias/ReLU)."""
    h = x_nchw.reshape(x_nchw.shape[0], -1)
    for i in range(1, 5):
        h = jnp.dot(h.astype(jnp.bfloat16),
                    params[f"w{i}"].astype(jnp.bfloat16),
                    preferred_element_type=jnp.float32)
        h = jnp.maximum(h + params[f"b{i}"], 0.0)
    return h


if __name__ == "__main__":
    # Small shapes consistent with the module: image_shape=(C,H,W)=(4,16,16),
    # batch=2, num_classes=10.
    N, C, H, W = 2, 4, 16, 16
    NUM_CLASSES = 10
    IN_FEATURES = C * H * W

    key = jax.random.PRNGKey(0)
    key, kx = jax.random.split(key)
    x = jax.random.normal(kx, (N, C, H, W), jnp.float32)

    params = init_params(key, IN_FEATURES, NUM_CLASSES)
    prepped = jax.tree_util.tree_map(
        jax.block_until_ready,
        prepare_params(params, in_features=IN_FEATURES,
                       num_classes=NUM_CLASSES))   # one-time weight prep

    out = johan_model_forward(x, prepped, num_classes=NUM_CLASSES)
    out = jax.block_until_ready(out)
    assert out.shape == (N, NUM_CLASSES), out.shape

    # Tight check vs a reference using the same bf16 quantization.
    ref_q = reference_forward_bf16(x, params)
    assert jnp.allclose(out, ref_q, atol=1e-4, rtol=1e-4), \
        "mismatch vs bf16-quantized reference"

    # Loose check vs the exact f32 PyTorch-equivalent forward
    # (bounds the bf16 quantization error).
    ref_f32 = reference_forward_f32(x, params)
    assert jnp.allclose(out, ref_f32, atol=5e-2, rtol=5e-2), \
        "mismatch vs f32 reference beyond bf16 tolerance"

    # Exercise the multi-tile path (remainder tile + even grid steps).
    key, kx2 = jax.random.split(key)
    x_big = jax.random.normal(kx2, (530, C, H, W), jnp.float32)
    out_big = jax.block_until_ready(
        johan_model_forward(x_big, prepped, num_classes=NUM_CLASSES))
    assert out_big.shape == (530, NUM_CLASSES), out_big.shape
    ref_big = reference_forward_bf16(x_big, params)
    assert jnp.allclose(out_big, ref_big, atol=1e-4, rtol=1e-4), \
        "multi-tile mismatch vs bf16-quantized reference"

    print("KERNEL_OK")
</pallas_src>

<mosaic_0001>
module attributes {stable_mosaic.version = 11 : i64} {
  func.func @_mlp_kernel(%arg0: i32, %arg1: memref<8x1024xf32, #tpu.memory_space<vmem>>, %arg2: memref<1024x128xbf16, #tpu.memory_space<vmem>>, %arg3: memref<2x128x128xbf16, #tpu.memory_space<vmem>>, %arg4: memref<128x128xbf16, #tpu.memory_space<vmem>>, %arg5: memref<8x128xf32, #tpu.memory_space<vmem>>, %arg6: memref<8x128xf32, #tpu.memory_space<vmem>>) attributes {dimension_semantics = [#tpu.dimension_semantics<parallel>], iteration_bounds = array<i64: 1>, scalar_prefetch = 0 : i64, scratch_operands = 0 : i64, tpu.core_type = #tpu.core_type<tc>, window_params = [{transform_indices = @transform_0, window_bounds = array<i64: 8, 1024>}, {pipeline_mode = #tpu.pipeline_mode<synchronous>, transform_indices = @transform_1, window_bounds = array<i64: 1024, 128>}, {pipeline_mode = #tpu.pipeline_mode<synchronous>, transform_indices = @transform_2, window_bounds = array<i64: 2, 128, 128>}, {pipeline_mode = #tpu.pipeline_mode<synchronous>, transform_indices = @transform_3, window_bounds = array<i64: 128, 128>}, {pipeline_mode = #tpu.pipeline_mode<synchronous>, transform_indices = @transform_4, window_bounds = array<i64: 8, 128>}, {transform_indices = @transform_5, window_bounds = array<i64: 8, 128>}]} {
    %c0 = arith.constant 0 : index
    %c0_0 = arith.constant 0 : index
    %0 = vector.load %arg5[%c0, %c0_0] : memref<8x128xf32, #tpu.memory_space<vmem>>, vector<8x128xf32>
    %c0_1 = arith.constant 0 : index
    %c0_2 = arith.constant 0 : index
    %1 = vector.load %arg1[%c0_1, %c0_2] : memref<8x1024xf32, #tpu.memory_space<vmem>>, vector<8x1024xf32>
    %2 = arith.truncf %1 : vector<8x1024xf32> to vector<8x1024xbf16>
    %c0_3 = arith.constant 0 : index
    %c0_4 = arith.constant 0 : index
    %3 = vector.load %arg2[%c0_3, %c0_4] : memref<1024x128xbf16, #tpu.memory_space<vmem>>, vector<1024x128xbf16>
    %cst = arith.constant dense<0.000000e+00> : vector<8x128xf32>
    %4 = tpu.matmul %2, %3, %cst {dimension_numbers = #tpu.dot_dimension_numbers<[1], [0], [0], [1], [0, 0, 1, 1], [], []>} : vector<8x1024xbf16>, vector<1024x128xbf16>, vector<8x128xf32> -> vector<8x128xf32>
    %5 = vector.extract_strided_slice %0 {offsets = [0, 0], sizes = [1, 128], strides = [1, 1]} : vector<8x128xf32> to vector<1x128xf32>
    %6 = vector.broadcast %5 : vector<1x128xf32> to vector<8x128xf32>
    %7 = arith.addf %4, %6 : vector<8x128xf32>
    %cst_5 = arith.constant 0.000000e+00 : f32
    %8 = vector.broadcast %cst_5 : f32 to vector<8x128xf32>
    %9 = arith.maximumf %7, %8 : vector<8x128xf32>
    %10 = arith.truncf %9 : vector<8x128xf32> to vector<8x128xbf16>
    %c0_6 = arith.constant 0 : index
    %c0_7 = arith.constant 0 : index
    %c0_8 = arith.constant 0 : index
    %11 = vector.load %arg3[%c0_6, %c0_7, %c0_8] : memref<2x128x128xbf16, #tpu.memory_space<vmem>>, vector<1x128x128xbf16>
    %12 = vector.shape_cast %11 : vector<1x128x128xbf16> to vector<128x128xbf16>
    %cst_9 = arith.constant dense<0.000000e+00> : vector<8x128xf32>
    %13 = tpu.matmul %10, %12, %cst_9 {dimension_numbers = #tpu.dot_dimension_numbers<[1], [0], [0], [1], [0, 0, 1, 1], [], []>} : vector<8x128xbf16>, vector<128x128xbf16>, vector<8x128xf32> -> vector<8x128xf32>
    %14 = vector.extract_strided_slice %0 {offsets = [1, 0], sizes = [1, 128], strides = [1, 1]} : vector<8x128xf32> to vector<1x128xf32>
    %15 = vector.broadcast %14 : vector<1x128xf32> to vector<8x128xf32>
    %16 = arith.addf %13, %15 : vector<8x128xf32>
    %cst_10 = arith.constant 0.000000e+00 : f32
    %17 = vector.broadcast %cst_10 : f32 to vector<8x128xf32>
    %18 = arith.maximumf %16, %17 : vector<8x128xf32>
    %19 = arith.truncf %18 : vector<8x128xf32> to vector<8x128xbf16>
    %c1 = arith.constant 1 : index
    %c0_11 = arith.constant 0 : index
    %c0_12 = arith.constant 0 : index
    %20 = vector.load %arg3[%c1, %c0_11, %c0_12] : memref<2x128x128xbf16, #tpu.memory_space<vmem>>, vector<1x128x128xbf16>
    %21 = vector.shape_cast %20 : vector<1x128x128xbf16> to vector<128x128xbf16>
    %cst_13 = arith.constant dense<0.000000e+00> : vector<8x128xf32>
    %22 = tpu.matmul %19, %21, %cst_13 {dimension_numbers = #tpu.dot_dimension_numbers<[1], [0], [0], [1], [0, 0, 1, 1], [], []>} : vector<8x128xbf16>, vector<128x128xbf16>, vector<8x128xf32> -> vector<8x128xf32>
    %23 = vector.extract_strided_slice %0 {offsets = [2, 0], sizes = [1, 128], strides = [1, 1]} : vector<8x128xf32> to vector<1x128xf32>
    %24 = vector.broadcast %23 : vector<1x128xf32> to vector<8x128xf32>
    %25 = arith.addf %22, %24 : vector<8x128xf32>
    %cst_14 = arith.constant 0.000000e+00 : f32
    %26 = vector.broadcast %cst_14 : f32 to vector<8x128xf32>
    %27 = arith.maximumf %25, %26 : vector<8x128xf32>
    %28 = arith.truncf %27 : vector<8x128xf32> to vector<8x128xbf16>
    %c0_15 = arith.constant 0 : index
    %c0_16 = arith.constant 0 : index
    %29 = vector.load %arg4[%c0_15, %c0_16] : memref<128x128xbf16, #tpu.memory_space<vmem>>, vector<128x128xbf16>
    %cst_17 = arith.constant dense<0.000000e+00> : vector<8x128xf32>
    %30 = tpu.matmul %28, %29, %cst_17 {dimension_numbers = #tpu.dot_dimension_numbers<[1], [0], [0], [1], [0, 0, 1, 1], [], []>} : vector<8x128xbf16>, vector<128x128xbf16>, vector<8x128xf32> -> vector<8x128xf32>
    %31 = vector.extract_strided_slice %0 {offsets = [3, 0], sizes = [1, 128], strides = [1, 1]} : vector<8x128xf32> to vector<1x128xf32>
    %32 = vector.broadcast %31 : vector<1x128xf32> to vector<8x128xf32>
    %33 = arith.addf %30, %32 : vector<8x128xf32>
    %cst_18 = arith.constant 0.000000e+00 : f32
    %34 = vector.broadcast %cst_18 : f32 to vector<8x128xf32>
    %35 = arith.maximumf %33, %34 : vector<8x128xf32>
    %c0_19 = arith.constant 0 : index
    %c0_20 = arith.constant 0 : index
    %36 = vector.load %arg6[%c0_19, %c0_20] : memref<8x128xf32, #tpu.memory_space<vmem>>, vector<8x128xf32>
    tpu.vector_store %arg6[%c0_19, %c0_20], %35 {strides = array<i32>} : memref<8x128xf32, #tpu.memory_space<vmem>>, vector<8x128xf32>,
    return
  }
  func.func @transform_0(%arg0: i32) -> (i32, i32) {
    %c0_i32 = arith.constant 0 : i32
    %c0_i32_0 = arith.constant 0 : i32
    return %arg0, %c0_i32 : i32, i32
  }
  func.func @transform_1(%arg0: i32) -> (i32, i32) {
    %c0_i32 = arith.constant 0 : i32
    %c0_i32_0 = arith.constant 0 : i32
    %c0_i32_1 = arith.constant 0 : i32
    return %c0_i32, %c0_i32_0 : i32, i32
  }
  func.func @transform_2(%arg0: i32) -> (i32, i32, i32) {
    %c0_i32 = arith.constant 0 : i32
    %c0_i32_0 = arith.constant 0 : i32
    %c0_i32_1 = arith.constant 0 : i32
    %c0_i32_2 = arith.constant 0 : i32
    return %c0_i32, %c0_i32_0, %c0_i32_1 : i32, i32, i32
  }
  func.func @transform_3(%arg0: i32) -> (i32, i32) {
    %c0_i32 = arith.constant 0 : i32
    %c0_i32_0 = arith.constant 0 : i32
    %c0_i32_1 = arith.constant 0 : i32
    return %c0_i32, %c0_i32_0 : i32, i32
  }
  func.func @transform_4(%arg0: i32) -> (i32, i32) {
    %c0_i32 = arith.constant 0 : i32
    %c0_i32_0 = arith.constant 0 : i32
    %c0_i32_1 = arith.constant 0 : i32
    return %c0_i32, %c0_i32_0 : i32, i32
  }
  func.func @transform_5(%arg0: i32) -> (i32, i32) {
    %c0_i32 = arith.constant 0 : i32
    %c0_i32_0 = arith.constant 0 : i32
    return %arg0, %c0_i32 : i32, i32
  }
}

</mosaic_0001>

<llo_original>
// kernel: johan_model_forward.1
$region0: #{johan_model_forward.1}
  #allocation0 [shape = 'u32[]', space=smem, size = 0x4, offset = 0x4, fixed_abs, tag = 'smem constant byte address 0x4 - core index']
  #allocation1 [shape = 'u32[144,128]{1,0:T(1,128)}', space=vmem, size = 0x12000, scoped, tag = 'internal scratch']
  %s0 = inlined_call_operand.vmem [shape: f32[8,1024], index: 0, kind: input, shape index: {}]
  %s1 = inlined_call_operand.hbm [shape: bf16[1024,128], index: 1, kind: input, shape index: {}]
  %s2 = inlined_call_operand.vmem [shape: bf16[2,128,128], index: 2, kind: input, shape index: {}]
  %s3 = inlined_call_operand.vmem [shape: bf16[128,128], index: 3, kind: input, shape index: {}]
  %s4 = inlined_call_operand.vmem [shape: f32[8,128], index: 4, kind: input, shape index: {}]
  %s5 = inlined_call_operand.vmem [shape: f32[8,128], index: 5, kind: output, shape index: {}]
  %s6 = sld [smem:[#allocation0]]
  $region34: #{johan_model_forward.1} parent=0
    _
  %s8 = ssub.s32 1, %s6
  %s9 = scalar_select 0, %s8, %s6
  $region1: #{johan_model_forward.1} parent=0
    #allocation2 [shape = 'u8[262144]{0}', space=vmem, size = 0x40000, scoped, tag = 'input window, operand 1, single buffered']
    #allocation3 [shape = 's32[1]{0}', space=sflag, size = 0x4, scoped, tag = 'scoped memory for johan_model_forward.1']
    %10 = vsyncpa [#allocation3], 0
    // Predicated region
    $region2: #{johan_model_forward.1} parent=1 // pred_check
      _
    $region3: #{johan_model_forward.1} parent=1 // pred_check_branch
      %12 = sbr.rel (0) target = $region5
    $region4: #{johan_model_forward.1} parent=1 // pred_region
      _
    $region5: #{johan_model_forward.1} parent=1 // pred_fallthru
      _
    // Predicated region
    $region6: #{johan_model_forward.1} parent=1 // pred_check
      _
    $region7: #{johan_model_forward.1} parent=1 // pred_check_branch
      %14 = sbr.rel (0) target = $region9
    $region8: #{johan_model_forward.1} parent=1 // pred_region
      %s16 = ssub.s32 8192, 8192
      %17 = vsyncadd [#allocation3], %s16
      %s18 = sshll.u32 [#allocation2], 4
      %s19 = int_to_ptr.vmem [resolvable:$true] %s18
      %24 = dma.hbm_to_vmem [thread:$0]  %s1, 8192, %s19, [#allocation3], 64, 64, 4
    $region9: #{johan_model_forward.1} parent=1 // pred_fallthru
      _
    // Predicated region
    $region10: #{johan_model_forward.1} parent=1 // pred_check
      _
    $region11: #{johan_model_forward.1} parent=1 // pred_check_branch
      %26 = sbr.rel (0) target = $region13
    $region12: #{johan_model_forward.1} parent=1 // pred_region
      _
    $region13: #{johan_model_forward.1} parent=1 // pred_fallthru
      _
    // Predicated region
    $region14: #{johan_model_forward.1} parent=1 // pred_check
      _
    $region15: #{johan_model_forward.1} parent=1 // pred_check_branch
      %28 = sbr.rel (0) target = $region17
    $region16: #{johan_model_forward.1} parent=1 // pred_region
      _
    $region17: #{johan_model_forward.1} parent=1 // pred_fallthru
      _
    // Predicated region
    $region18: #{johan_model_forward.1} parent=1 // pred_check
      _
    $region19: #{johan_model_forward.1} parent=1 // pred_check_branch
      %30 = sbr.rel (0) target = $region21
    $region20: #{johan_model_forward.1} parent=1 // pred_region
      _
    $region21: #{johan_model_forward.1} parent=1 // pred_fallthru
      _
    // Predicated region
    $region22: #{johan_model_forward.1} parent=1 // pred_check
      _
    $region23: #{johan_model_forward.1} parent=1 // pred_check_branch
      %32 = sbr.rel (0) target = $region25
    $region24: #{johan_model_forward.1} parent=1 // pred_region
      %33 = dma.done [#allocation3], 8192
    $region25: #{johan_model_forward.1} parent=1 // pred_fallthru
      _
    %v35 = vld [vmem:[%s4] sm:$0xff]
    %v36 = vld [vmem:[%s0] sm:$0xff]
    %v37 = vld [vmem:[%s0 + $0x8] sm:$0xff]
    %v38 = vld [vmem:[%s0 + $0x10] sm:$0xff]
    %v39 = vld [vmem:[%s0 + $0x18] sm:$0xff]
    %v40 = vld [vmem:[%s0 + $0x20] sm:$0xff]
    %v41 = vld [vmem:[%s0 + $0x28] sm:$0xff]
    %v42 = vld [vmem:[%s0 + $0x30] sm:$0xff]
    %v43 = vld [vmem:[%s0 + $0x38] sm:$0xff]
    %v44 = vpack.c.bf16 %v36, %v36
    %v45 = vpack.c.bf16 %v37, %v37
    %v46 = vpack.c.bf16 %v38, %v38
    %v47 = vpack.c.bf16 %v39, %v39
    %v48 = vpack.c.bf16 %v40, %v40
    %v49 = vpack.c.bf16 %v41, %v41
    %v50 = vpack.c.bf16 %v42, %v42
    %v51 = vpack.c.bf16 %v43, %v43
    %v52 = vld [vmem:[#allocation2] sm:$0xf]
    %v53 = vld [vmem:[#allocation2 + $0x4] sm:$0xf]
    %v54 = vld [vmem:[#allocation2 + $0x8] sm:$0xf]
    %v55 = vld [vmem:[#allocation2 + $0xc] sm:$0xf]
    %v56 = vld [vmem:[#allocation2 + $0x10] sm:$0xf]
    %v57 = vld [vmem:[#allocation2 + $0x14] sm:$0xf]
    %v58 = vld [vmem:[#allocation2 + $0x18] sm:$0xf]
    %v59 = vld [vmem:[#allocation2 + $0x1c] sm:$0xf]
    %v60 = vld [vmem:[#allocation2 + $0x20] sm:$0xf]
    %v61 = vld [vmem:[#allocation2 + $0x24] sm:$0xf]
    %v62 = vld [vmem:[#allocation2 + $0x28] sm:$0xf]
    %v63 = vld [vmem:[#allocation2 + $0x2c] sm:$0xf]
    %v64 = vld [vmem:[#allocation2 + $0x30] sm:$0xf]
    %v65 = vld [vmem:[#allocation2 + $0x34] sm:$0xf]
    %v66 = vld [vmem:[#allocation2 + $0x38] sm:$0xf]
    %v67 = vld [vmem:[#allocation2 + $0x3c] sm:$0xf]
    %v68 = vld [vmem:[#allocation2 + $0x40] sm:$0xf]
    %v69 = vld [vmem:[#allocation2 + $0x44] sm:$0xf]
    %v70 = vld [vmem:[#allocation2 + $0x48] sm:$0xf]
    %v71 = vld [vmem:[#allocation2 + $0x4c] sm:$0xf]
    %v72 = vld [vmem:[#allocation2 + $0x50] sm:$0xf]
    %v73 = vld [vmem:[#allocation2 + $0x54] sm:$0xf]
    %v74 = vld [vmem:[#allocation2 + $0x58] sm:$0xf]
    %v75 = vld [vmem:[#allocation2 + $0x5c] sm:$0xf]
    %v76 = vld [vmem:[#allocation2 + $0x60] sm:$0xf]
    %v77 = vld [vmem:[#allocation2 + $0x64] sm:$0xf]
    %v78 = vld [vmem:[#allocation2 + $0x68] sm:$0xf]
    %v79 = vld [vmem:[#allocation2 + $0x6c] sm:$0xf]
    %v80 = vld [vmem:[#allocation2 + $0x70] sm:$0xf]
    %v81 = vld [vmem:[#allocation2 + $0x74] sm:$0xf]
    %v82 = vld [vmem:[#allocation2 + $0x78] sm:$0xf]
    %v83 = vld [vmem:[#allocation2 + $0x7c] sm:$0xf]
    %v84 = vld [vmem:[#allocation2 + $0x80] sm:$0xf]
    %v85 = vld [vmem:[#allocation2 + $0x84] sm:$0xf]
    %v86 = vld [vmem:[#allocation2 + $0x88] sm:$0xf]
    %v87 = vld [vmem:[#allocation2 + $0x8c] sm:$0xf]
    %v88 = vld [vmem:[#allocation2 + $0x90] sm:$0xf]
    %v89 = vld [vmem:[#allocation2 + $0x94] sm:$0xf]
    %v90 = vld [vmem:[#allocation2 + $0x98] sm:$0xf]
    %v91 = vld [vmem:[#allocation2 + $0x9c] sm:$0xf]
    %v92 = vld [vmem:[#allocation2 + $0xa0] sm:$0xf]
    %v93 = vld [vmem:[#allocation2 + $0xa4] sm:$0xf]
    %v94 = vld [vmem:[#allocation2 + $0xa8] sm:$0xf]
    %v95 = vld [vmem:[#allocation2 + $0xac] sm:$0xf]
    %v96 = vld [vmem:[#allocation2 + $0xb0] sm:$0xf]
    %v97 = vld [vmem:[#allocation2 + $0xb4] sm:$0xf]
    %v98 = vld [vmem:[#allocation2 + $0xb8] sm:$0xf]
    %v99 = vld [vmem:[#allocation2 + $0xbc] sm:$0xf]
    %v100 = vld [vmem:[#allocation2 + $0xc0] sm:$0xf]
    %v101 = vld [vmem:[#allocation2 + $0xc4] sm:$0xf]
    %v102 = vld [vmem:[#allocation2 + $0xc8] sm:$0xf]
    %v103 = vld [vmem:[#allocation2 + $0xcc] sm:$0xf]
    %v104 = vld [vmem:[#allocation2 + $0xd0] sm:$0xf]
    %v105 = vld [vmem:[#allocation2 + $0xd4] sm:$0xf]
    %v106 = vld [vmem:[#allocation2 + $0xd8] sm:$0xf]
    %v107 = vld [vmem:[#allocation2 + $0xdc] sm:$0xf]
    %v108 = vld [vmem:[#allocation2 + $0xe0] sm:$0xf]
    %v109 = vld [vmem:[#allocation2 + $0xe4] sm:$0xf]
    %v110 = vld [vmem:[#allocation2 + $0xe8] sm:$0xf]
    %v111 = vld [vmem:[#allocation2 + $0xec] sm:$0xf]
    %v112 = vld [vmem:[#allocation2 + $0xf0] sm:$0xf]
    %v113 = vld [vmem:[#allocation2 + $0xf4] sm:$0xf]
    %v114 = vld [vmem:[#allocation2 + $0xf8] sm:$0xf]
    %v115 = vld [vmem:[#allocation2 + $0xfc] sm:$0xf]
    %v116 = vld [vmem:[#allocation2 + $0x100] sm:$0xf]
    %v117 = vld [vmem:[#allocation2 + $0x104] sm:$0xf]
    %v118 = vld [vmem:[#allocation2 + $0x108] sm:$0xf]
    %v119 = vld [vmem:[#allocation2 + $0x10c] sm:$0xf]
    %v120 = vld [vmem:[#allocation2 + $0x110] sm:$0xf]
    %v121 = vld [vmem:[#allocation2 + $0x114] sm:$0xf]
    %v122 = vld [vmem:[#allocation2 + $0x118] sm:$0xf]
    %v123 = vld [vmem:[#allocation2 + $0x11c] sm:$0xf]
    %v124 = vld [vmem:[#allocation2 + $0x120] sm:$0xf]
    %v125 = vld [vmem:[#allocation2 + $0x124] sm:$0xf]
    %v126 = vld [vmem:[#allocation2 + $0x128] sm:$0xf]
    %v127 = vld [vmem:[#allocation2 + $0x12c] sm:$0xf]
    %v128 = vld [vmem:[#allocation2 + $0x130] sm:$0xf]
    %v129 = vld [vmem:[#allocation2 + $0x134] sm:$0xf]
    %v130 = vld [vmem:[#allocation2 + $0x138] sm:$0xf]
    %v131 = vld [vmem:[#allocation2 + $0x13c] sm:$0xf]
    %v132 = vld [vmem:[#allocation2 + $0x140] sm:$0xf]
    %v133 = vld [vmem:[#allocation2 + $0x144] sm:$0xf]
    %v134 = vld [vmem:[#allocation2 + $0x148] sm:$0xf]
    %v135 = vld [vmem:[#allocation2 + $0x14c] sm:$0xf]
    %v136 = vld [vmem:[#allocation2 + $0x150] sm:$0xf]
    %v137 = vld [vmem:[#allocation2 + $0x154] sm:$0xf]
    %v138 = vld [vmem:[#allocation2 + $0x158] sm:$0xf]
    %v139 = vld [vmem:[#allocation2 + $0x15c] sm:$0xf]
    %v140 = vld [vmem:[#allocation2 + $0x160] sm:$0xf]
    %v141 = vld [vmem:[#allocation2 + $0x164] sm:$0xf]
    %v142 = vld [vmem:[#allocation2 + $0x168] sm:$0xf]
    %v143 = vld [vmem:[#allocation2 + $0x16c] sm:$0xf]
    %v144 = vld [vmem:[#allocation2 + $0x170] sm:$0xf]
    %v145 = vld [vmem:[#allocation2 + $0x174] sm:$0xf]
    %v146 = vld [vmem:[#allocation2 + $0x178] sm:$0xf]
    %v147 = vld [vmem:[#allocation2 + $0x17c] sm:$0xf]
    %v148 = vld [vmem:[#allocation2 + $0x180] sm:$0xf]
    %v149 = vld [vmem:[#allocation2 + $0x184] sm:$0xf]
    %v150 = vld [vmem:[#allocation2 + $0x188] sm:$0xf]
    %v151 = vld [vmem:[#allocation2 + $0x18c] sm:$0xf]
    %v152 = vld [vmem:[#allocation2 + $0x190] sm:$0xf]
    %v153 = vld [vmem:[#allocation2 + $0x194] sm:$0xf]
    %v154 = vld [vmem:[#allocation2 + $0x198] sm:$0xf]
    %v155 = vld [vmem:[#allocation2 + $0x19c] sm:$0xf]
    %v156 = vld [vmem:[#allocation2 + $0x1a0] sm:$0xf]
    %v157 = vld [vmem:[#allocation2 + $0x1a4] sm:$0xf]
    %v158 = vld [vmem:[#allocation2 + $0x1a8] sm:$0xf]
    %v159 = vld [vmem:[#allocation2 + $0x1ac] sm:$0xf]
    %v160 = vld [vmem:[#allocation2 + $0x1b0] sm:$0xf]
    %v161 = vld [vmem:[#allocation2 + $0x1b4] sm:$0xf]
    %v162 = vld [vmem:[#allocation2 + $0x1b8] sm:$0xf]
    %v163 = vld [vmem:[#allocation2 + $0x1bc] sm:$0xf]
    %v164 = vld [vmem:[#allocation2 + $0x1c0] sm:$0xf]
    %v165 = vld [vmem:[#allocation2 + $0x1c4] sm:$0xf]
    %v166 = vld [vmem:[#allocation2 + $0x1c8] sm:$0xf]
    %v167 = vld [vmem:[#allocation2 + $0x1cc] sm:$0xf]
    %v168 = vld [vmem:[#allocation2 + $0x1d0] sm:$0xf]
    %v169 = vld [vmem:[#allocation2 + $0x1d4] sm:$0xf]
    %v170 = vld [vmem:[#allocation2 + $0x1d8] sm:$0xf]
    %v171 = vld [vmem:[#allocation2 + $0x1dc] sm:$0xf]
    %v172 = vld [vmem:[#allocation2 + $0x1e0] sm:$0xf]
    %v173 = vld [vmem:[#allocation2 + $0x1e4] sm:$0xf]
    %v174 = vld [vmem:[#allocation2 + $0x1e8] sm:$0xf]
    %v175 = vld [vmem:[#allocation2 + $0x1ec] sm:$0xf]
    %v176 = vld [vmem:[#allocation2 + $0x1f0] sm:$0xf]
    %v177 = vld [vmem:[#allocation2 + $0x1f4] sm:$0xf]
    %v178 = vld [vmem:[#allocation2 + $0x1f8] sm:$0xf]
    %v179 = vld [vmem:[#allocation2 + $0x1fc] sm:$0xf]
    %v180 = vlaneseq
    %v181 = vshrl.u32 %v180, 7
    %v182 = vsub.s32 0, %v181
    %v183 = vrot.slane %v35, %v182
    %v312 = vunpack.c.l.b16 %v52
    %v313 = vunpack.c.l.b16 %v53
    %v314 = vunpack.c.l.b16 %v54
    %v315 = vunpack.c.l.b16 %v55
    %v316 = vunpack.c.l.b16 %v56
    %v317 = vunpack.c.l.b16 %v57
    %v318 = vunpack.c.l.b16 %v58
    %v319 = vunpack.c.l.b16 %v59
    %v320 = vunpack.c.l.b16 %v60
    %v321 = vunpack.c.l.b16 %v61
    %v322 = vunpack.c.l.b16 %v62
    %v323 = vunpack.c.l.b16 %v63
    %v324 = vunpack.c.l.b16 %v64
    %v325 = vunpack.c.l.b16 %v65
    %v326 = vunpack.c.l.b16 %v66
    %v327 = vunpack.c.l.b16 %v67
    %v328 = vunpack.c.l.b16 %v68
    %v329 = vunpack.c.l.b16 %v69
    %v330 = vunpack.c.l.b16 %v70
    %v331 = vunpack.c.l.b16 %v71
    %v332 = vunpack.c.l.b16 %v72
    %v333 = vunpack.c.l.b16 %v73
    %v334 = vunpack.c.l.b16 %v74
    %v335 = vunpack.c.l.b16 %v75
    %v336 = vunpack.c.l.b16 %v76
    %v337 = vunpack.c.l.b16 %v77
    %v338 = vunpack.c.l.b16 %v78
    %v339 = vunpack.c.l.b16 %v79
    %v340 = vunpack.c.l.b16 %v80
    %v341 = vunpack.c.l.b16 %v81
    %v342 = vunpack.c.l.b16 %v82
    %v343 = vunpack.c.l.b16 %v83
    %v344 = vunpack.c.l.b16 %v84
    %v345 = vunpack.c.l.b16 %v85
    %v346 = vunpack.c.l.b16 %v86
    %v347 = vunpack.c.l.b16 %v87
    %v348 = vunpack.c.l.b16 %v88
    %v349 = vunpack.c.l.b16 %v89
    %v350 = vunpack.c.l.b16 %v90
    %v351 = vunpack.c.l.b16 %v91
    %v352 = vunpack.c.l.b16 %v92
    %v353 = vunpack.c.l.b16 %v93
    %v354 = vunpack.c.l.b16 %v94
    %v355 = vunpack.c.l.b16 %v95
    %v356 = vunpack.c.l.b16 %v96
    %v357 = vunpack.c.l.b16 %v97
    %v358 = vunpack.c.l.b16 %v98
    %v359 = vunpack.c.l.b16 %v99
    %v360 = vunpack.c.l.b16 %v100
    %v361 = vunpack.c.l.b16 %v101
    %v362 = vunpack.c.l.b16 %v102
    %v363 = vunpack.c.l.b16 %v103
    %v364 = vunpack.c.l.b16 %v104
    %v365 = vunpack.c.l.b16 %v105
    %v366 = vunpack.c.l.b16 %v106
    %v367 = vunpack.c.l.b16 %v107
    %v368 = vunpack.c.l.b16 %v108
    %v369 = vunpack.c.l.b16 %v109
    %v370 = vunpack.c.l.b16 %v110
    %v371 = vunpack.c.l.b16 %v111
    %v372 = vunpack.c.l.b16 %v112
    %v373 = vunpack.c.l.b16 %v113
    %v374 = vunpack.c.l.b16 %v114
    %v375 = vunpack.c.l.b16 %v115
    %v376 = vunpack.c.l.b16 %v116
    %v377 = vunpack.c.l.b16 %v117
    %v378 = vunpack.c.l.b16 %v118
    %v379 = vunpack.c.l.b16 %v119
    %v380 = vunpack.c.l.b16 %v120
    %v381 = vunpack.c.l.b16 %v121
    %v382 = vunpack.c.l.b16 %v122
    %v383 = vunpack.c.l.b16 %v123
    %v384 = vunpack.c.l.b16 %v124
    %v385 = vunpack.c.l.b16 %v125
    %v386 = vunpack.c.l.b16 %v126
    %v387 = vunpack.c.l.b16 %v127
    %v388 = vunpack.c.l.b16 %v128
    %v389 = vunpack.c.l.b16 %v129
    %v390 = vunpack.c.l.b16 %v130
    %v391 = vunpack.c.l.b16 %v131
    %v392 = vunpack.c.l.b16 %v132
    %v393 = vunpack.c.l.b16 %v133
    %v394 = vunpack.c.l.b16 %v134
    %v395 = vunpack.c.l.b16 %v135
    %v396 = vunpack.c.l.b16 %v136
    %v397 = vunpack.c.l.b16 %v137
    %v398 = vunpack.c.l.b16 %v138
    %v399 = vunpack.c.l.b16 %v139
    %v400 = vunpack.c.l.b16 %v140
    %v401 = vunpack.c.l.b16 %v141
    %v402 = vunpack.c.l.b16 %v142
    %v403 = vunpack.c.l.b16 %v143
    %v404 = vunpack.c.l.b16 %v144
    %v405 = vunpack.c.l.b16 %v145
    %v406 = vunpack.c.l.b16 %v146
    %v407 = vunpack.c.l.b16 %v147
    %v408 = vunpack.c.l.b16 %v148
    %v409 = vunpack.c.l.b16 %v149
    %v410 = vunpack.c.l.b16 %v150
    %v411 = vunpack.c.l.b16 %v151
    %v412 = vunpack.c.l.b16 %v152
    %v413 = vunpack.c.l.b16 %v153
    %v414 = vunpack.c.l.b16 %v154
    %v415 = vunpack.c.l.b16 %v155
    %v416 = vunpack.c.l.b16 %v156
    %v417 = vunpack.c.l.b16 %v157
    %v418 = vunpack.c.l.b16 %v158
    %v419 = vunpack.c.l.b16 %v159
    %v420 = vunpack.c.l.b16 %v160
    %v421 = vunpack.c.l.b16 %v161
    %v422 = vunpack.c.l.b16 %v162
    %v423 = vunpack.c.l.b16 %v163
    %v424 = vunpack.c.l.b16 %v164
    %v425 = vunpack.c.l.b16 %v165
    %v426 = vunpack.c.l.b16 %v166
    %v427 = vunpack.c.l.b16 %v167
    %v428 = vunpack.c.l.b16 %v168
    %v429 = vunpack.c.l.b16 %v169
    %v430 = vunpack.c.l.b16 %v170
    %v431 = vunpack.c.l.b16 %v171
    %v432 = vunpack.c.l.b16 %v172
    %v433 = vunpack.c.l.b16 %v173
    %v434 = vunpack.c.l.b16 %v174
    %v435 = vunpack.c.l.b16 %v175
    %v436 = vunpack.c.l.b16 %v176
    %v437 = vunpack.c.l.b16 %v177
    %v438 = vunpack.c.l.b16 %v178
    %v439 = vunpack.c.l.b16 %v179
    %v440 = vpack.c.b16 %v313, %v312
    %v441 = vpack.c.b16 %v315, %v314
    %v442 = vpack.c.b16 %v317, %v316
    %v443 = vpack.c.b16 %v319, %v318
    %v444 = vpack.c.b16 %v321, %v320
    %v445 = vpack.c.b16 %v323, %v322
    %v446 = vpack.c.b16 %v325, %v324
    %v447 = vpack.c.b16 %v327, %v326
    %v448 = vpack.c.b16 %v329, %v328
    %v449 = vpack.c.b16 %v331, %v330
    %v450 = vpack.c.b16 %v333, %v332
    %v451 = vpack.c.b16 %v335, %v334
    %v452 = vpack.c.b16 %v337, %v336
    %v453 = vpack.c.b16 %v339, %v338
    %v454 = vpack.c.b16 %v341, %v340
    %v455 = vpack.c.b16 %v343, %v342
    %v456 = vpack.c.b16 %v345, %v344
    %v457 = vpack.c.b16 %v347, %v346
    %v458 = vpack.c.b16 %v349, %v348
    %v459 = vpack.c.b16 %v351, %v350
    %v460 = vpack.c.b16 %v353, %v352
    %v461 = vpack.c.b16 %v355, %v354
    %v462 = vpack.c.b16 %v357, %v356
    %v463 = vpack.c.b16 %v359, %v358
    %v464 = vpack.c.b16 %v361, %v360
    %v465 = vpack.c.b16 %v363, %v362
    %v466 = vpack.c.b16 %v365, %v364
    %v467 = vpack.c.b16 %v367, %v366
    %v468 = vpack.c.b16 %v369, %v368
    %v469 = vpack.c.b16 %v371, %v370
    %v470 = vpack.c.b16 %v373, %v372
    %v471 = vpack.c.b16 %v375, %v374
    %v472 = vpack.c.b16 %v377, %v376
    %v473 = vpack.c.b16 %v379, %v378
    %v474 = vpack.c.b16 %v381, %v380
    %v475 = vpack.c.b16 %v383, %v382
    %v476 = vpack.c.b16 %v385, %v384
    %v477 = vpack.c.b16 %v387, %v386
    %v478 = vpack.c.b16 %v389, %v388
    %v479 = vpack.c.b16 %v391, %v390
    %v480 = vpack.c.b16 %v393, %v392
    %v481 = vpack.c.b16 %v395, %v394
    %v482 = vpack.c.b16 %v397, %v396
    %v483 = vpack.c.b16 %v399, %v398
    %v484 = vpack.c.b16 %v401, %v400
    %v485 = vpack.c.b16 %v403, %v402
    %v486 = vpack.c.b16 %v405, %v404
    %v487 = vpack.c.b16 %v407, %v406
    %v488 = vpack.c.b16 %v409, %v408
    %v489 = vpack.c.b16 %v411, %v410
    %v490 = vpack.c.b16 %v413, %v412
    %v491 = vpack.c.b16 %v415, %v414
    %v492 = vpack.c.b16 %v417, %v416
    %v493 = vpack.c.b16 %v419, %v418
    %v494 = vpack.c.b16 %v421, %v420
    %v495 = vpack.c.b16 %v423, %v422
    %v496 = vpack.c.b16 %v425, %v424
    %v497 = vpack.c.b16 %v427, %v426
    %v498 = vpack.c.b16 %v429, %v428
    %v499 = vpack.c.b16 %v431, %v430
    %v500 = vpack.c.b16 %v433, %v432
    %v501 = vpack.c.b16 %v435, %v434
    %v502 = vpack.c.b16 %v437, %v436
    %v503 = vpack.c.b16 %v439, %v438
    %568 = vmatprep.subr.bf16.mxu0 0
    %569 = vmatpush1.bf16.msra.mxu0 %v440
    %570 = vmatprep.subr.bf16.mxu0 0
    %571 = vmatpush1.bf16.msra.mxu0 %v441
    %572 = vmatprep.subr.bf16.mxu0 0
    %573 = vmatpush1.bf16.msra.mxu0 %v442
    %574 = vmatprep.subr.bf16.mxu0 0
    %575 = vmatpush1.bf16.msra.mxu0 %v443
    %576 = vmatprep.subr.bf16.mxu0 0
    %577 = vmatpush1.bf16.msra.mxu0 %v444
    %578 = vmatprep.subr.bf16.mxu0 0
    %579 = vmatpush1.bf16.msra.mxu0 %v445
    %580 = vmatprep.subr.bf16.mxu0 0
    %581 = vmatpush1.bf16.msra.mxu0 %v446
    %582 = vmatprep.subr.bf16.mxu0 0
    %583 = vmatpush1.bf16.msra.mxu0 %v447
    %584 = vmatprep.subr.bf16.mxu0 0
    %585 = vmatpush1.bf16.msra.mxu0 %v448
    %586 = vmatprep.subr.bf16.mxu0 0
    %587 = vmatpush1.bf16.msra.mxu0 %v449
    %588 = vmatprep.subr.bf16.mxu0 0
    %589 = vmatpush1.bf16.msra.mxu0 %v450
    %590 = vmatprep.subr.bf16.mxu0 0
    %591 = vmatpush1.bf16.msra.mxu0 %v451
    %592 = vmatprep.subr.bf16.mxu0 0
    %593 = vmatpush1.bf16.msra.mxu0 %v452
    %594 = vmatprep.subr.bf16.mxu0 0
    %595 = vmatpush1.bf16.msra.mxu0 %v453
    %596 = vmatprep.subr.bf16.mxu0 0
    %597 = vmatpush1.bf16.msra.mxu0 %v454
    %598 = vmatprep.subr.bf16.mxu0 0
    %599 = vmatpush1.bf16.msra.mxu0 %v455
    %600 = vmatprep.mubr.bf16.mxu0 %v45
    %601 = vmatmul.mubr.bf16.gmra.mrb[0].mxu0 %v44
    %v602 = vpop.f32.mrb[0].mxu0
    %v603 = vadd.f32 %v183, %v602
    %v604 = vpop.f32.mrb[0].mxu0
    %v605 = vpop.f32.mrb[0].mxu0
    %v606 = vpop.f32.mrb[0].mxu0
    %607 = vdwg.mxu0
    %608 = vmatprep.subr.bf16.mxu0 0
    %609 = vmatpush1.bf16.msra.mxu0 %v456
    %610 = vmatprep.subr.bf16.mxu0 0
    %611 = vmatpush1.bf16.msra.mxu0 %v457
    %612 = vmatprep.subr.bf16.mxu0 0
    %613 = vmatpush1.bf16.msra.mxu0 %v458
    %614 = vmatprep.subr.bf16.mxu0 0
    %615 = vmatpush1.bf16.msra.mxu0 %v459
    %616 = vmatprep.subr.bf16.mxu0 0
    %617 = vmatpush1.bf16.msra.mxu0 %v460
    %618 = vmatprep.subr.bf16.mxu0 0
    %619 = vmatpush1.bf16.msra.mxu0 %v461
    %620 = vmatprep.subr.bf16.mxu0 0
    %621 = vmatpush1.bf16.msra.mxu0 %v462
    %622 = vmatprep.subr.bf16.mxu0 0
    %623 = vmatpush1.bf16.msra.mxu0 %v463
    %624 = vmatprep.subr.bf16.mxu0 0
    %625 = vmatpush1.bf16.msra.mxu0 %v464
    %626 = vmatprep.subr.bf16.mxu0 0
    %627 = vmatpush1.bf16.msra.mxu0 %v465
    %628 = vmatprep.subr.bf16.mxu0 0
    %629 = vmatpush1.bf16.msra.mxu0 %v466
    %630 = vmatprep.subr.bf16.mxu0 0
    %631 = vmatpush1.bf16.msra.mxu0 %v467
    %632 = vmatprep.subr.bf16.mxu0 0
    %633 = vmatpush1.bf16.msra.mxu0 %v468
    %634 = vmatprep.subr.bf16.mxu0 0
    %635 = vmatpush1.bf16.msra.mxu0 %v469
    %636 = vmatprep.subr.bf16.mxu0 0
    %637 = vmatpush1.bf16.msra.mxu0 %v470
    %638 = vmatprep.subr.bf16.mxu0 0
    %639 = vmatpush1.bf16.msra.mxu0 %v471
    %640 = vmatprep.mubr.bf16.mxu0 %v47
    %641 = vmatmul.mubr.bf16.gmra.mrb[0].mxu0 %v46
    %v642 = vpop.f32.mrb[0].mxu0
    %v643 = vadd.f32 %v603, %v642
    %v644 = vpop.f32.mrb[0].mxu0
    %v645 = vpop.f32.mrb[0].mxu0
    %v646 = vpop.f32.mrb[0].mxu0
    %647 = vdwg.mxu0
    %648 = vmatprep.subr.bf16.mxu0 0
    %649 = vmatpush1.bf16.msra.mxu0 %v472
    %650 = vmatprep.subr.bf16.mxu0 0
    %651 = vmatpush1.bf16.msra.mxu0 %v473
    %652 = vmatprep.subr.bf16.mxu0 0
    %653 = vmatpush1.bf16.msra.mxu0 %v474
    %654 = vmatprep.subr.bf16.mxu0 0
    %655 = vmatpush1.bf16.msra.mxu0 %v475
    %656 = vmatprep.subr.bf16.mxu0 0
    %657 = vmatpush1.bf16.msra.mxu0 %v476
    %658 = vmatprep.subr.bf16.mxu0 0
    %659 = vmatpush1.bf16.msra.mxu0 %v477
    %660 = vmatprep.subr.bf16.mxu0 0
    %661 = vmatpush1.bf16.msra.mxu0 %v478
    %662 = vmatprep.subr.bf16.mxu0 0
    %663 = vmatpush1.bf16.msra.mxu0 %v479
    %664 = vmatprep.subr.bf16.mxu0 0
    %665 = vmatpush1.bf16.msra.mxu0 %v480
    %666 = vmatprep.subr.bf16.mxu0 0
    %667 = vmatpush1.bf16.msra.mxu0 %v481
    %668 = vmatprep.subr.bf16.mxu0 0
    %669 = vmatpush1.bf16.msra.mxu0 %v482
    %670 = vmatprep.subr.bf16.mxu0 0
    %671 = vmatpush1.bf16.msra.mxu0 %v483
    %672 = vmatprep.subr.bf16.mxu0 0
    %673 = vmatpush1.bf16.msra.mxu0 %v484
    %674 = vmatprep.subr.bf16.mxu0 0
    %675 = vmatpush1.bf16.msra.mxu0 %v485
    %676 = vmatprep.subr.bf16.mxu0 0
    %677 = vmatpush1.bf16.msra.mxu0 %v486
    %678 = vmatprep.subr.bf16.mxu0 0
    %679 = vmatpush1.bf16.msra.mxu0 %v487
    %680 = vmatprep.mubr.bf16.mxu0 %v49
    %681 = vmatmul.mubr.bf16.gmra.mrb[0].mxu0 %v48
    %v682 = vpop.f32.mrb[0].mxu0
    %v683 = vadd.f32 %v643, %v682
    %v684 = vpop.f32.mrb[0].mxu0
    %v685 = vpop.f32.mrb[0].mxu0
    %v686 = vpop.f32.mrb[0].mxu0
    %687 = vdwg.mxu0
    %688 = vmatprep.subr.bf16.mxu0 0
    %689 = vmatpush1.bf16.msra.mxu0 %v488
    %690 = vmatprep.subr.bf16.mxu0 0
    %691 = vmatpush1.bf16.msra.mxu0 %v489
    %692 = vmatprep.subr.bf16.mxu0 0
    %693 = vmatpush1.bf16.msra.mxu0 %v490
    %694 = vmatprep.subr.bf16.mxu0 0
    %695 = vmatpush1.bf16.msra.mxu0 %v491
    %696 = vmatprep.subr.bf16.mxu0 0
    %697 = vmatpush1.bf16.msra.mxu0 %v492
    %698 = vmatprep.subr.bf16.mxu0 0
    %699 = vmatpush1.bf16.msra.mxu0 %v493
    %700 = vmatprep.subr.bf16.mxu0 0
    %701 = vmatpush1.bf16.msra.mxu0 %v494
    %702 = vmatprep.subr.bf16.mxu0 0
    %703 = vmatpush1.bf16.msra.mxu0 %v495
    %704 = vmatprep.subr.bf16.mxu0 0
    %705 = vmatpush1.bf16.msra.mxu0 %v496
    %706 = vmatprep.subr.bf16.mxu0 0
    %707 = vmatpush1.bf16.msra.mxu0 %v497
    %708 = vmatprep.subr.bf16.mxu0 0
    %709 = vmatpush1.bf16.msra.mxu0 %v498
    %710 = vmatprep.subr.bf16.mxu0 0
    %711 = vmatpush1.bf16.msra.mxu0 %v499
    %712 = vmatprep.subr.bf16.mxu0 0
    %713 = vmatpush1.bf16.msra.mxu0 %v500
    %714 = vmatprep.subr.bf16.mxu0 0
    %715 = vmatpush1.bf16.msra.mxu0 %v501
    %716 = vmatprep.subr.bf16.mxu0 0
    %717 = vmatpush1.bf16.msra.mxu0 %v502
    %718 = vmatprep.subr.bf16.mxu0 0
    %719 = vmatpush1.bf16.msra.mxu0 %v503
    %720 = vmatprep.mubr.bf16.mxu0 %v51
    %721 = vmatmul.mubr.bf16.gmra.mrb[0].mxu0 %v50
    %v722 = vpop.f32.mrb[0].mxu0
    %v723 = vadd.f32 %v683, %v722
    %v724 = vpop.f32.mrb[0].mxu0
    %v725 = vpop.f32.mrb[0].mxu0
    %v726 = vpop.f32.mrb[0].mxu0
    %727 = vdwg.mxu0
    %v728 = vmax.f32 %v723, 0.0
    %v729 = vpack.c.bf16 %v728, %v728
    %v730 = vld [vmem:[%s2] sm:$0xf]
    %v731 = vld [vmem:[%s2 + $0x4] sm:$0xf]
    %v732 = vld [vmem:[%s2 + $0x8] sm:$0xf]
    %v733 = vld [vmem:[%s2 + $0xc] sm:$0xf]
    %v734 = vld [vmem:[%s2 + $0x10] sm:$0xf]
    %v735 = vld [vmem:[%s2 + $0x14] sm:$0xf]
    %v736 = vld [vmem:[%s2 + $0x18] sm:$0xf]
    %v737 = vld [vmem:[%s2 + $0x1c] sm:$0xf]
    %v738 = vld [vmem:[%s2 + $0x20] sm:$0xf]
    %v739 = vld [vmem:[%s2 + $0x24] sm:$0xf]
    %v740 = vld [vmem:[%s2 + $0x28] sm:$0xf]
    %v741 = vld [vmem:[%s2 + $0x2c] sm:$0xf]
    %v742 = vld [vmem:[%s2 + $0x30] sm:$0xf]
    %v743 = vld [vmem:[%s2 + $0x34] sm:$0xf]
    %v744 = vld [vmem:[%s2 + $0x38] sm:$0xf]
    %v745 = vld [vmem:[%s2 + $0x3c] sm:$0xf]
    %v746 = vlaneseq
    %v747 = vshrl.u32 %v746, 7
    %v748 = vsub.s32 1, %v747
    %v749 = vrot.slane %v35, %v748
    %v766 = vunpack.c.l.b16 %v730
    %v767 = vunpack.c.l.b16 %v731
    %v768 = vunpack.c.l.b16 %v732
    %v769 = vunpack.c.l.b16 %v733
    %v770 = vunpack.c.l.b16 %v734
    %v771 = vunpack.c.l.b16 %v735
    %v772 = vunpack.c.l.b16 %v736
    %v773 = vunpack.c.l.b16 %v737
    %v774 = vunpack.c.l.b16 %v738
    %v775 = vunpack.c.l.b16 %v739
    %v776 = vunpack.c.l.b16 %v740
    %v777 = vunpack.c.l.b16 %v741
    %v778 = vunpack.c.l.b16 %v742
    %v779 = vunpack.c.l.b16 %v743
    %v780 = vunpack.c.l.b16 %v744
    %v781 = vunpack.c.l.b16 %v745
    %v782 = vpack.c.b16 %v767, %v766
    %v783 = vpack.c.b16 %v769, %v768
    %v784 = vpack.c.b16 %v771, %v770
    %v785 = vpack.c.b16 %v773, %v772
    %v786 = vpack.c.b16 %v775, %v774
    %v787 = vpack.c.b16 %v777, %v776
    %v788 = vpack.c.b16 %v779, %v778
    %v789 = vpack.c.b16 %v781, %v780
    %798 = vmatprep.subr.bf16.mxu0 0
    %799 = vmatpush1.bf16.msra.mxu0 %v782
    %800 = vmatprep.subr.bf16.mxu0 0
    %801 = vmatpush1.bf16.msra.mxu0 %v783
    %802 = vmatprep.subr.bf16.mxu0 0
    %803 = vmatpush1.bf16.msra.mxu0 %v784
    %804 = vmatprep.subr.bf16.mxu0 0
    %805 = vmatpush1.bf16.msra.mxu0 %v785
    %806 = vmatprep.subr.bf16.mxu0 0
    %807 = vmatpush1.bf16.msra.mxu0 %v786
    %808 = vmatprep.subr.bf16.mxu0 0
    %809 = vmatpush1.bf16.msra.mxu0 %v787
    %810 = vmatprep.subr.bf16.mxu0 0
    %811 = vmatpush1.bf16.msra.mxu0 %v788
    %812 = vmatprep.subr.bf16.mxu0 0
    %813 = vmatpush1.bf16.msra.mxu0 %v789
    %814 = vmatprep.subr.bf16.mxu0 0
    %815 = vmatpush1.bf16.msra.mxu0 0
    %816 = vmatprep.subr.bf16.mxu0 0
    %817 = vmatpush1.bf16.msra.mxu0 0
    %818 = vmatprep.subr.bf16.mxu0 0
    %819 = vmatpush1.bf16.msra.mxu0 0
    %820 = vmatprep.subr.bf16.mxu0 0
    %821 = vmatpush1.bf16.msra.mxu0 0
    %822 = vmatprep.subr.bf16.mxu0 0
    %823 = vmatpush1.bf16.msra.mxu0 0
    %824 = vmatprep.subr.bf16.mxu0 0
    %825 = vmatpush1.bf16.msra.mxu0 0
    %826 = vmatprep.subr.bf16.mxu0 0
    %827 = vmatpush1.bf16.msra.mxu0 0
    %828 = vmatprep.subr.bf16.mxu0 0
    %829 = vmatpush1.bf16.msra.mxu0 0
    %830 = vmatprep.mubr.bf16.mxu0 0
    %831 = vmatmul.mubr.bf16.gmra.mrb[0].mxu0 %v729
    %v832 = vpop.f32.mrb[0].mxu0
    %v833 = vadd.f32 %v749, %v832
    %v834 = vpop.f32.mrb[0].mxu0
    %v835 = vpop.f32.mrb[0].mxu0
    %v836 = vpop.f32.mrb[0].mxu0
    %837 = vdwg.mxu0
    %v838 = vmax.f32 %v833, 0.0
    %v839 = vpack.c.bf16 %v838, %v838
    %s840 = scalar_lea.vmem %s2, 64
    %v841 = vld [vmem:[%s840] sm:$0xf]
    %v842 = vld [vmem:[%s840 + $0x4] sm:$0xf]
    %v843 = vld [vmem:[%s840 + $0x8] sm:$0xf]
    %v844 = vld [vmem:[%s840 + $0xc] sm:$0xf]
    %v845 = vld [vmem:[%s840 + $0x10] sm:$0xf]
    %v846 = vld [vmem:[%s840 + $0x14] sm:$0xf]
    %v847 = vld [vmem:[%s840 + $0x18] sm:$0xf]
    %v848 = vld [vmem:[%s840 + $0x1c] sm:$0xf]
    %v849 = vld [vmem:[%s840 + $0x20] sm:$0xf]
    %v850 = vld [vmem:[%s840 + $0x24] sm:$0xf]
    %v851 = vld [vmem:[%s840 + $0x28] sm:$0xf]
    %v852 = vld [vmem:[%s840 + $0x2c] sm:$0xf]
    %v853 = vld [vmem:[%s840 + $0x30] sm:$0xf]
    %v854 = vld [vmem:[%s840 + $0x34] sm:$0xf]
    %v855 = vld [vmem:[%s840 + $0x38] sm:$0xf]
    %v856 = vld [vmem:[%s840 + $0x3c] sm:$0xf]
    %v857 = vlaneseq
    %v858 = vshrl.u32 %v857, 7
    %v859 = vsub.s32 2, %v858
    %v860 = vrot.slane %v35, %v859
    %v877 = vunpack.c.l.b16 %v841
    %v878 = vunpack.c.l.b16 %v842
    %v879 = vunpack.c.l.b16 %v843
    %v880 = vunpack.c.l.b16 %v844
    %v881 = vunpack.c.l.b16 %v845
    %v882 = vunpack.c.l.b16 %v846
    %v883 = vunpack.c.l.b16 %v847
    %v884 = vunpack.c.l.b16 %v848
    %v885 = vunpack.c.l.b16 %v849
    %v886 = vunpack.c.l.b16 %v850
    %v887 = vunpack.c.l.b16 %v851
    %v888 = vunpack.c.l.b16 %v852
    %v889 = vunpack.c.l.b16 %v853
    %v890 = vunpack.c.l.b16 %v854
    %v891 = vunpack.c.l.b16 %v855
    %v892 = vunpack.c.l.b16 %v856
    %v893 = vpack.c.b16 %v878, %v877
    %v894 = vpack.c.b16 %v880, %v879
    %v895 = vpack.c.b16 %v882, %v881
    %v896 = vpack.c.b16 %v884, %v883
    %v897 = vpack.c.b16 %v886, %v885
    %v898 = vpack.c.b16 %v888, %v887
    %v899 = vpack.c.b16 %v890, %v889
    %v900 = vpack.c.b16 %v892, %v891
    %909 = vmatprep.subr.bf16.mxu0 0
    %910 = vmatpush1.bf16.msra.mxu0 %v893
    %911 = vmatprep.subr.bf16.mxu0 0
    %912 = vmatpush1.bf16.msra.mxu0 %v894
    %913 = vmatprep.subr.bf16.mxu0 0
    %914 = vmatpush1.bf16.msra.mxu0 %v895
    %915 = vmatprep.subr.bf16.mxu0 0
    %916 = vmatpush1.bf16.msra.mxu0 %v896
    %917 = vmatprep.subr.bf16.mxu0 0
    %918 = vmatpush1.bf16.msra.mxu0 %v897
    %919 = vmatprep.subr.bf16.mxu0 0
    %920 = vmatpush1.bf16.msra.mxu0 %v898
    %921 = vmatprep.subr.bf16.mxu0 0
    %922 = vmatpush1.bf16.msra.mxu0 %v899
    %923 = vmatprep.subr.bf16.mxu0 0
    %924 = vmatpush1.bf16.msra.mxu0 %v900
    %925 = vmatprep.subr.bf16.mxu0 0
    %926 = vmatpush1.bf16.msra.mxu0 0
    %927 = vmatprep.subr.bf16.mxu0 0
    %928 = vmatpush1.bf16.msra.mxu0 0
    %929 = vmatprep.subr.bf16.mxu0 0
    %930 = vmatpush1.bf16.msra.mxu0 0
    %931 = vmatprep.subr.bf16.mxu0 0
    %932 = vmatpush1.bf16.msra.mxu0 0
    %933 = vmatprep.subr.bf16.mxu0 0
    %934 = vmatpush1.bf16.msra.mxu0 0
    %935 = vmatprep.subr.bf16.mxu0 0
    %936 = vmatpush1.bf16.msra.mxu0 0
    %937 = vmatprep.subr.bf16.mxu0 0
    %938 = vmatpush1.bf16.msra.mxu0 0
    %939 = vmatprep.subr.bf16.mxu0 0
    %940 = vmatpush1.bf16.msra.mxu0 0
    %941 = vmatprep.mubr.bf16.mxu0 0
    %942 = vmatmul.mubr.bf16.gmra.mrb[0].mxu0 %v839
    %v943 = vpop.f32.mrb[0].mxu0
    %v944 = vadd.f32 %v860, %v943
    %v945 = vpop.f32.mrb[0].mxu0
    %v946 = vpop.f32.mrb[0].mxu0
    %v947 = vpop.f32.mrb[0].mxu0
    %948 = vdwg.mxu0
    %v949 = vmax.f32 %v944, 0.0
    %v950 = vpack.c.bf16 %v949, %v949
    %v951 = vld [vmem:[%s3] sm:$0xf]
    %v952 = vld [vmem:[%s3 + $0x4] sm:$0xf]
    %v953 = vld [vmem:[%s3 + $0x8] sm:$0xf]
    %v954 = vld [vmem:[%s3 + $0xc] sm:$0xf]
    %v955 = vld [vmem:[%s3 + $0x10] sm:$0xf]
    %v956 = vld [vmem:[%s3 + $0x14] sm:$0xf]
    %v957 = vld [vmem:[%s3 + $0x18] sm:$0xf]
    %v958 = vld [vmem:[%s3 + $0x1c] sm:$0xf]
    %v959 = vld [vmem:[%s3 + $0x20] sm:$0xf]
    %v960 = vld [vmem:[%s3 + $0x24] sm:$0xf]
    %v961 = vld [vmem:[%s3 + $0x28] sm:$0xf]
    %v962 = vld [vmem:[%s3 + $0x2c] sm:$0xf]
    %v963 = vld [vmem:[%s3 + $0x30] sm:$0xf]
    %v964 = vld [vmem:[%s3 + $0x34] sm:$0xf]
    %v965 = vld [vmem:[%s3 + $0x38] sm:$0xf]
    %v966 = vld [vmem:[%s3 + $0x3c] sm:$0xf]
    %v967 = vlaneseq
    %v968 = vshrl.u32 %v967, 7
    %v969 = vsub.s32 3, %v968
    %v970 = vrot.slane %v35, %v969
    %v987 = vunpack.c.l.b16 %v951
    %v988 = vunpack.c.l.b16 %v952
    %v989 = vunpack.c.l.b16 %v953
    %v990 = vunpack.c.l.b16 %v954
    %v991 = vunpack.c.l.b16 %v955
    %v992 = vunpack.c.l.b16 %v956
    %v993 = vunpack.c.l.b16 %v957
    %v994 = vunpack.c.l.b16 %v958
    %v995 = vunpack.c.l.b16 %v959
    %v996 = vunpack.c.l.b16 %v960
    %v997 = vunpack.c.l.b16 %v961
    %v998 = vunpack.c.l.b16 %v962
    %v999 = vunpack.c.l.b16 %v963
    %v1000 = vunpack.c.l.b16 %v964
    %v1001 = vunpack.c.l.b16 %v965
    %v1002 = vunpack.c.l.b16 %v966
    %v1003 = vpack.c.b16 %v988, %v987
    %v1004 = vpack.c.b16 %v990, %v989
    %v1005 = vpack.c.b16 %v992, %v991
    %v1006 = vpack.c.b16 %v994, %v993
    %v1007 = vpack.c.b16 %v996, %v995
    %v1008 = vpack.c.b16 %v998, %v997
    %v1009 = vpack.c.b16 %v1000, %v999
    %v1010 = vpack.c.b16 %v1002, %v1001
    %1019 = vmatprep.subr.bf16.mxu0 0
    %1020 = vmatpush1.bf16.msra.mxu0 %v1003
    %1021 = vmatprep.subr.bf16.mxu0 0
    %1022 = vmatpush1.bf16.msra.mxu0 %v1004
    %1023 = vmatprep.subr.bf16.mxu0 0
    %1024 = vmatpush1.bf16.msra.mxu0 %v1005
    %1025 = vmatprep.subr.bf16.mxu0 0
    %1026 = vmatpush1.bf16.msra.mxu0 %v1006
    %1027 = vmatprep.subr.bf16.mxu0 0
    %1028 = vmatpush1.bf16.msra.mxu0 %v1007
    %1029 = vmatprep.subr.bf16.mxu0 0
    %1030 = vmatpush1.bf16.msra.mxu0 %v1008
    %1031 = vmatprep.subr.bf16.mxu0 0
    %1032 = vmatpush1.bf16.msra.mxu0 %v1009
    %1033 = vmatprep.subr.bf16.mxu0 0
    %1034 = vmatpush1.bf16.msra.mxu0 %v1010
    %1035 = vmatprep.subr.bf16.mxu0 0
    %1036 = vmatpush1.bf16.msra.mxu0 0
    %1037 = vmatprep.subr.bf16.mxu0 0
    %1038 = vmatpush1.bf16.msra.mxu0 0
    %1039 = vmatprep.subr.bf16.mxu0 0
    %1040 = vmatpush1.bf16.msra.mxu0 0
    %1041 = vmatprep.subr.bf16.mxu0 0
    %1042 = vmatpush1.bf16.msra.mxu0 0
    %1043 = vmatprep.subr.bf16.mxu0 0
    %1044 = vmatpush1.bf16.msra.mxu0 0
    %1045 = vmatprep.subr.bf16.mxu0 0
    %1046 = vmatpush1.bf16.msra.mxu0 0
    %1047 = vmatprep.subr.bf16.mxu0 0
    %1048 = vmatpush1.bf16.msra.mxu0 0
    %1049 = vmatprep.subr.bf16.mxu0 0
    %1050 = vmatpush1.bf16.msra.mxu0 0
    %1051 = vmatprep.mubr.bf16.mxu0 0
    %1052 = vmatmul.mubr.bf16.gmra.mrb[0].mxu0 %v950
    %v1053 = vpop.f32.mrb[0].mxu0
    %v1054 = vadd.f32 %v970, %v1053
    %v1055 = vpop.f32.mrb[0].mxu0
    %v1056 = vpop.f32.mrb[0].mxu0
    %v1057 = vpop.f32.mrb[0].mxu0
    %1058 = vdwg.mxu0
    %v1059 = vmax.f32 %v1054, 0.0
    %1060 = vst [vmem:[%s5] sm:$0xff] %v1059
    // Predicated region
    $region26: #{johan_model_forward.1} parent=1 // pred_check
      _
    $region27: #{johan_model_forward.1} parent=1 // pred_check_branch
      %1062 = sbr.rel (0) target = $region29
    $region28: #{johan_model_forward.1} parent=1 // pred_region
      _
    $region29: #{johan_model_forward.1} parent=1 // pred_fallthru
      _
    // Predicated region
    $region30: #{johan_model_forward.1} parent=1 // pred_check
      _
    $region31: #{johan_model_forward.1} parent=1 // pred_check_branch
      %1064 = sbr.rel (0) target = $region33
    $region32: #{johan_model_forward.1} parent=1 // pred_region
      _
    $region33: #{johan_model_forward.1} parent=1 // pred_fallthru
      _
    %1065 = vsyncpa [#allocation3], 1

</llo_original>
